<compile_context>
chip_gen: v7x
topology: tpu7x:2x2x1
jax: 0.10.0
libtpu: 0.0.40
codegen_flags: <defaults>
</compile_context>

<pallas_src>
import functools

import jax
import jax.numpy as jnp
from jax.experimental import pallas as pl
from jax.experimental.pallas import tpu as pltpu


_LANE = 128


# ----------------------------------------------------------------------------
# Generation-aware sizing helpers
# ----------------------------------------------------------------------------
def _round_up(x, m):
    return (x + m - 1) // m * m


def _vmem_limit_bytes():
    """Scoped-VMEM request: half of physical VMEM, capped at 64 MiB."""
    try:
        cap = int(getattr(pltpu.get_tpu_info(), "vmem_capacity_bytes",
                          64 * 1024 * 1024))
    except Exception:
        cap = 64 * 1024 * 1024
    return min(cap // 2, 64 * 1024 * 1024)


def _pick_tm(M, per_row_bytes, resident_bytes, budget_bytes):
    """Largest power-of-two row tile whose working set fits the budget."""
    avail = max(budget_bytes - resident_bytes, 1 * 1024 * 1024)
    tm = 1024
    while tm > 16 and tm * per_row_bytes > avail:
        tm //= 2
    return min(tm, M)


# ----------------------------------------------------------------------------
# Pallas kernels
# ----------------------------------------------------------------------------
def _matmul_bias_kernel(a_ref, w_ref, b_ref, o_ref, *, relu):
    acc = jnp.dot(a_ref[...], w_ref[...], preferred_element_type=jnp.float32)
    acc = acc + b_ref[...]                      # (1, N) broadcasts over rows
    if relu:
        acc = jnp.maximum(acc, 0.0)
    o_ref[...] = acc.astype(o_ref.dtype)


def _matmul_nobias_kernel(a_ref, w_ref, o_ref, *, relu):
    acc = jnp.dot(a_ref[...], w_ref[...], preferred_element_type=jnp.float32)
    if relu:
        acc = jnp.maximum(acc, 0.0)
    o_ref[...] = acc.astype(o_ref.dtype)


def _bn_stats_kernel(x_ref, sum_ref, sq_ref):
    @pl.when(pl.program_id(0) == 0)
    def _():
        sum_ref[...] = jnp.zeros_like(sum_ref)
        sq_ref[...] = jnp.zeros_like(sq_ref)
    x = x_ref[...].astype(jnp.float32)
    sum_ref[...] += jnp.sum(x, axis=0, keepdims=True)
    sq_ref[...] += jnp.sum(x * x, axis=0, keepdims=True)


def _scale_shift_relu_kernel(x_ref, sc_ref, sh_ref, o_ref):
    y = x_ref[...].astype(jnp.float32) * sc_ref[...] + sh_ref[...]
    o_ref[...] = jnp.maximum(y, 0.0).astype(o_ref.dtype)


# ----------------------------------------------------------------------------
# Pallas wrappers
# ----------------------------------------------------------------------------
def matmul_bias(a, w, b=None, *, relu, out_dtype=jnp.bfloat16):
    """a: (M, K), w: (K, N), optional b: (N,) -> (M, N) in out_dtype.

    bf16 MXU operands, f32 accumulation; tiled over M; weight resident;
    lane (N) dim padded to a multiple of 128 for unmasked stores.
    """
    M, K = a.shape
    K2, N = w.shape
    assert K == K2

    Np = max(_LANE, _round_up(N, _LANE))
    a16 = a.astype(jnp.bfloat16)
    w16 = jnp.pad(w.astype(jnp.bfloat16), ((0, 0), (0, Np - N)))

    out_bytes = jnp.dtype(out_dtype).itemsize
    per_row = 2 * (K * 2 + Np * out_bytes)      # double-buffered A + out rows
    resident = 2 * K * Np * 2 + Np * 4          # weight buffers + bias
    limit = _vmem_limit_bytes()
    tm = _pick_tm(M, per_row, resident, (3 * limit) // 4)

    Mp = _round_up(M, tm)
    if Mp != M:
        a16 = jnp.pad(a16, ((0, Mp - M), (0, 0)))
    grid = (Mp // tm,)

    cost = pl.CostEstimate(
        flops=2 * M * K * Np,
        transcendentals=0,
        bytes_accessed=M * K * 2 + K * Np * 2 + M * Np * out_bytes,
    )
    cparams = pltpu.CompilerParams(
        dimension_semantics=("parallel",),
        vmem_limit_bytes=limit,
    )

    in_specs = [
        pl.BlockSpec((tm, K), lambda i: (i, 0)),     # A row-tile
        pl.BlockSpec((K, Np), lambda i: (0, 0)),     # weight, resident
    ]
    operands = [a16, w16]
    if b is not None:
        bp = jnp.pad(b.astype(jnp.float32), (0, Np - N)).reshape(1, Np)
        in_specs.append(pl.BlockSpec((1, Np), lambda i: (0, 0)))
        operands.append(bp)
        kernel = functools.partial(_matmul_bias_kernel, relu=relu)
    else:
        kernel = functools.partial(_matmul_nobias_kernel, relu=relu)

    out = pl.pallas_call(
        kernel,
        out_shape=jax.ShapeDtypeStruct((Mp, Np), out_dtype),
        grid=grid,
        in_specs=in_specs,
        out_specs=pl.BlockSpec((tm, Np), lambda i: (i, 0)),
        compiler_params=cparams,
        cost_estimate=cost,
    )(*operands)
    return out[:M, :N]


def bn_relu(x2d, gamma, beta, *, eps=1e-5, out_dtype=jnp.bfloat16):
    """Training-mode batch norm (biased batch stats over rows per channel)
    followed by ReLU.  Pass 1: tiled reduction into resident (1, C) sums.
    Pass 2: tiled scale/shift + ReLU."""
    M, C = x2d.shape
    x16 = x2d.astype(jnp.bfloat16)

    per_row = 2 * (C * 2 + C * 2)               # double-buffered in + out rows
    limit = _vmem_limit_bytes()
    tm = _pick_tm(M, per_row, 8 * C * 4, (3 * limit) // 4)
    Mp = _round_up(M, tm)
    if Mp != M:
        # zero padding rows do not perturb sum / sum-of-squares
        x16 = jnp.pad(x16, ((0, Mp - M), (0, 0)))
    grid = (Mp // tm,)

    s, sq = pl.pallas_call(
        _bn_stats_kernel,
        out_shape=(jax.ShapeDtypeStruct((1, C), jnp.float32),
                   jax.ShapeDtypeStruct((1, C), jnp.float32)),
        grid=grid,
        in_specs=[pl.BlockSpec((tm, C), lambda i: (i, 0))],
        out_specs=(pl.BlockSpec((1, C), lambda i: (0, 0)),
                   pl.BlockSpec((1, C), lambda i: (0, 0))),
        compiler_params=pltpu.CompilerParams(
            dimension_semantics=("arbitrary",), vmem_limit_bytes=limit),
    )(x16)

    mean = s / M
    var = jnp.maximum(sq / M - mean * mean, 0.0)     # biased (train-mode) var
    inv = gamma.reshape(1, C).astype(jnp.float32) * jax.lax.rsqrt(var + eps)
    shift = beta.reshape(1, C).astype(jnp.float32) - mean * inv

    y = pl.pallas_call(
        _scale_shift_relu_kernel,
        out_shape=jax.ShapeDtypeStruct((Mp, C), out_dtype),
        grid=grid,
        in_specs=[pl.BlockSpec((tm, C), lambda i: (i, 0)),
                  pl.BlockSpec((1, C), lambda i: (0, 0)),
                  pl.BlockSpec((1, C), lambda i: (0, 0))],
        out_specs=pl.BlockSpec((tm, C), lambda i: (i, 0)),
        compiler_params=pltpu.CompilerParams(
            dimension_semantics=("parallel",), vmem_limit_bytes=limit),
    )(x16, inv, shift)
    return y[:M]


# ----------------------------------------------------------------------------
# JAX glue (layout / im2col / pooling)
# ----------------------------------------------------------------------------
def _im2col_3x3(x):
    """x: (B, H, W, C) NHWC bf16 -> (B*H*W, 9*C) bf16; patch order (kh,kw,c)."""
    # TODO(synk): fuse the 3x3 taps into the matmul kernel (9 accumulated
    # matmuls over shifted tiles) to avoid materializing the 9x im2col buffer.
    B, H, W, C = x.shape
    xp = jnp.pad(x, ((0, 0), (1, 1), (1, 1), (0, 0)))
    cols = [xp[:, dy:dy + H, dx:dx + W, :] for dy in range(3) for dx in range(3)]
    patches = jnp.concatenate(cols, axis=-1)          # (B, H, W, 9*C)
    return patches.reshape(B * H * W, 9 * C)


def conv3x3(x, w, b, *, relu, out_dtype=jnp.bfloat16):
    """x: (B,H,W,Cin) NHWC; w: (3,3,Cin,Cout); b: (Cout,) or None."""
    B, H, W, Cin = x.shape
    Cout = w.shape[-1]
    a = _im2col_3x3(x.astype(jnp.bfloat16))           # bf16 9x buffer
    wf = w.reshape(9 * Cin, Cout)                     # matches (kh, kw, c) order
    y = matmul_bias(a, wf, b, relu=relu, out_dtype=out_dtype)
    return y.reshape(B, H, W, Cout)


def bn_relu_nhwc(x, gamma, beta):
    B, H, W, C = x.shape
    y = bn_relu(x.reshape(B * H * W, C), gamma, beta)
    return y.reshape(B, H, W, C)


def maxpool(x, kh, kw):
    """Non-overlapping max pool, NHWC."""
    # TODO(synk): for conv1/conv4 the pool could be fused into the matmul
    # epilogue (pool over accumulator rows) to cut writeback traffic further.
    B, H, W, C = x.shape
    x = x.reshape(B, H // kh, kh, W // kw, kw, C)
    return x.max(axis=(2, 4))


# ----------------------------------------------------------------------------
# Parameters (deterministic synthetic init; conv std=0.1, bias=0, BN gamma=1)
# ----------------------------------------------------------------------------
def init_params(key, input_channels, dec_hid_dim):
    conv_dims = [(input_channels, 64), (64, 128), (128, 256),
                 (256, 256), (256, 512), (512, 512)]
    params = {}
    keys = jax.random.split(key, len(conv_dims) + 1)
    for i, (cin, cout) in enumerate(conv_dims):
        params[f"conv{i+1}_w"] = 0.1 * jax.random.normal(
            keys[i], (3, 3, cin, cout), dtype=jnp.float32)
        params[f"conv{i+1}_b"] = jnp.zeros((cout,), dtype=jnp.float32)
    for layer, ch in (("bn2", 128), ("bn3", 256), ("bn5", 512)):
        params[f"{layer}_g"] = jnp.ones((ch,), dtype=jnp.float32)
        params[f"{layer}_b"] = jnp.zeros((ch,), dtype=jnp.float32)
    params["lin_w"] = 0.1 * jax.random.normal(
        keys[-1], (512, dec_hid_dim), dtype=jnp.float32)
    params["lin_b"] = jnp.zeros((dec_hid_dim,), dtype=jnp.float32)
    return params


# ----------------------------------------------------------------------------
# Forward pass (encoding_type=None path of CNN_Encoder.forward)
# ----------------------------------------------------------------------------
def cnn_encoder_forward(src_nchw, params):
    """src_nchw: (B, C, H, W) like PyTorch.  Returns (B, H'*W', dec_hid_dim)."""
    x = jnp.transpose(src_nchw, (0, 2, 3, 1)).astype(jnp.bfloat16)  # -> NHWC

    # Conv(Cin,64) + ReLU + MaxPool(2,2)
    h = conv3x3(x, params["conv1_w"], params["conv1_b"], relu=True)
    h = maxpool(h, 2, 2)
    # Conv(64,128) + BN + ReLU + MaxPool(2,2)   (bias dropped: cancelled by BN)
    h = conv3x3(h, params["conv2_w"], None, relu=False)
    h = bn_relu_nhwc(h, params["bn2_g"], params["bn2_b"])
    h = maxpool(h, 2, 2)
    # Conv(128,256) + BN + ReLU                 (bias dropped: cancelled by BN)
    h = conv3x3(h, params["conv3_w"], None, relu=False)
    h = bn_relu_nhwc(h, params["bn3_g"], params["bn3_b"])
    # Conv(256,256) + ReLU + MaxPool(1,2)
    h = conv3x3(h, params["conv4_w"], params["conv4_b"], relu=True)
    h = maxpool(h, 1, 2)
    # Conv(256,512) + BN + ReLU                 (bias dropped: cancelled by BN)
    h = conv3x3(h, params["conv5_w"], None, relu=False)
    h = bn_relu_nhwc(h, params["bn5_g"], params["bn5_b"])
    # Conv(512,512) + ReLU
    h = conv3x3(h, params["conv6_w"], params["conv6_b"], relu=True)

    # torch.flatten(out, 2, -1).permute(0, 2, 1)  ==  NHWC reshape (B, H*W, C)
    B, H, W, C = h.shape
    feats = h.reshape(B * H * W, C)
    # self.linear(output): 512 -> dec_hid_dim  (f32 output)
    out = matmul_bias(feats, params["lin_w"], params["lin_b"], relu=False,
                      out_dtype=jnp.float32)
    return out.reshape(B, H * W, -1)

    # TODO(synk): 'row_encoding' / 'positional_features' branches (RowEncoding
    # LSTM, add_positional_features) are outside this module's definition and
    # are not implemented.


if __name__ == "__main__":
    B, C_IN, HW, DEC_HID = 2, 4, 16, 32
    key = jax.random.PRNGKey(0)
    k_x, k_p = jax.random.split(key)
    src = jax.random.normal(k_x, (B, C_IN, HW, HW), dtype=jnp.float32)  # NCHW
    params = init_params(k_p, C_IN, DEC_HID)

    out = cnn_encoder_forward(src, params)
    out = jax.block_until_ready(out)

    # Shape check: pools (2,2),(2,2),(1,2) -> spatial 4x2 -> seq len 8.
    assert out.shape == (B, (HW // 4) * (HW // 8), DEC_HID), out.shape
    assert bool(jnp.all(jnp.isfinite(out)))
    print("KERNEL_OK")
</pallas_src>

<mosaic_0001>
module attributes {stable_mosaic.version = 11 : i64} {
  func.func @_matmul_bias_kernel(%arg0: i32, %arg1: memref<512x36xbf16, #tpu.memory_space<vmem>>, %arg2: memref<36x128xbf16, #tpu.memory_space<vmem>>, %arg3: memref<1x128xf32, #tpu.memory_space<vmem>>, %arg4: memref<512x128xbf16, #tpu.memory_space<vmem>>) attributes {dimension_semantics = [#tpu.dimension_semantics<parallel>], iteration_bounds = array<i64: 1>, scalar_prefetch = 0 : i64, scratch_operands = 0 : i64, tpu.core_type = #tpu.core_type<tc>, window_params = [{transform_indices = @transform_0, window_bounds = array<i64: 512, 36>}, {pipeline_mode = #tpu.pipeline_mode<synchronous>, transform_indices = @transform_1, window_bounds = array<i64: 36, 128>}, {pipeline_mode = #tpu.pipeline_mode<synchronous>, transform_indices = @transform_2, window_bounds = array<i64: 1, 128>}, {transform_indices = @transform_3, window_bounds = array<i64: 512, 128>}]} {
    %c0 = arith.constant 0 : index
    %c0_0 = arith.constant 0 : index
    %0 = vector.load %arg1[%c0, %c0_0] : memref<512x36xbf16, #tpu.memory_space<vmem>>, vector<512x36xbf16>
    %c0_1 = arith.constant 0 : index
    %c0_2 = arith.constant 0 : index
    %1 = vector.load %arg2[%c0_1, %c0_2] : memref<36x128xbf16, #tpu.memory_space<vmem>>, vector<36x128xbf16>
    %cst = arith.constant dense<0.000000e+00> : vector<512x128xf32>
    %2 = tpu.matmul %0, %1, %cst {dimension_numbers = #tpu.dot_dimension_numbers<[1], [0], [0], [1], [0, 0, 1, 1], [], []>} : vector<512x36xbf16>, vector<36x128xbf16>, vector<512x128xf32> -> vector<512x128xf32>
    %c0_3 = arith.constant 0 : index
    %c0_4 = arith.constant 0 : index
    %3 = vector.load %arg3[%c0_3, %c0_4] : memref<1x128xf32, #tpu.memory_space<vmem>>, vector<1x128xf32>
    %4 = vector.broadcast %3 : vector<1x128xf32> to vector<512x128xf32>
    %5 = arith.addf %2, %4 : vector<512x128xf32>
    %cst_5 = arith.constant 0.000000e+00 : f32
    %6 = vector.broadcast %cst_5 : f32 to vector<512x128xf32>
    %7 = arith.maximumf %5, %6 : vector<512x128xf32>
    %8 = arith.truncf %7 : vector<512x128xf32> to vector<512x128xbf16>
    %c0_6 = arith.constant 0 : index
    %c0_7 = arith.constant 0 : index
    %9 = vector.load %arg4[%c0_6, %c0_7] : memref<512x128xbf16, #tpu.memory_space<vmem>>, vector<512x128xbf16>
    tpu.vector_store %arg4[%c0_6, %c0_7], %8 {strides = array<i32>} : memref<512x128xbf16, #tpu.memory_space<vmem>>, vector<512x128xbf16>,
    return
  }
  func.func @transform_0(%arg0: i32) -> (i32, i32) {
    %c0_i32 = arith.constant 0 : i32
    %c0_i32_0 = arith.constant 0 : i32
    return %arg0, %c0_i32 : i32, i32
  }
  func.func @transform_1(%arg0: i32) -> (i32, i32) {
    %c0_i32 = arith.constant 0 : i32
    %c0_i32_0 = arith.constant 0 : i32
    %c0_i32_1 = arith.constant 0 : i32
    return %c0_i32, %c0_i32_0 : i32, i32
  }
  func.func @transform_2(%arg0: i32) -> (i32, i32) {
    %c0_i32 = arith.constant 0 : i32
    %c0_i32_0 = arith.constant 0 : i32
    %c0_i32_1 = arith.constant 0 : i32
    return %c0_i32, %c0_i32_0 : i32, i32
  }
  func.func @transform_3(%arg0: i32) -> (i32, i32) {
    %c0_i32 = arith.constant 0 : i32
    %c0_i32_0 = arith.constant 0 : i32
    return %arg0, %c0_i32 : i32, i32
  }
}

</mosaic_0001>

<llo_original>
// kernel: tpu_custom_call.1
$region0: #{tpu_custom_call.1}
  #allocation0 [shape = 'u32[]', space=smem, size = 0x4, offset = 0x4, fixed_abs, tag = 'smem constant byte address 0x4 - core index']
  #allocation1 [shape = 'u32[144,128]{1,0:T(1,128)}', space=vmem, size = 0x12000, scoped, tag = 'internal scratch']
  %s0 = inlined_call_operand.vmem [shape: bf16[512,36], index: 0, kind: input, shape index: {}]
  %s1 = inlined_call_operand.vmem [shape: bf16[36,128], index: 1, kind: input, shape index: {}]
  %s2 = inlined_call_operand.vmem [shape: f32[1,128], index: 2, kind: input, shape index: {}]
  %s3 = inlined_call_operand.hbm [shape: bf16[512,128], index: 3, kind: output, shape index: {}]
  %s4 = sld [smem:[#allocation0]]
  $region22: #{tpu_custom_call.1} parent=0
    _
  %s6 = ssub.s32 1, %s4
  %s7 = scalar_select 0, %s6, %s4
  $region1: #{tpu_custom_call.1} parent=0
    #allocation2 [shape = 'u8[131072]{0}', space=vmem, size = 0x20000, scoped, tag = 'output window, operand 0, single buffered']
    #allocation3 [shape = 's32[1]{0}', space=sflag, size = 0x4, scoped, tag = 'scoped memory for tpu_custom_call.1']
    %8 = vsyncpa [#allocation3], 0
    // Predicated region
    $region2: #{tpu_custom_call.1} parent=1 // pred_check
      _
    $region3: #{tpu_custom_call.1} parent=1 // pred_check_branch
      %10 = sbr.rel (0) target = $region5
    $region4: #{tpu_custom_call.1} parent=1 // pred_region
      _
    $region5: #{tpu_custom_call.1} parent=1 // pred_fallthru
      _
    // Predicated region
    $region6: #{tpu_custom_call.1} parent=1 // pred_check
      _
    $region7: #{tpu_custom_call.1} parent=1 // pred_check_branch
      %12 = sbr.rel (0) target = $region9
    $region8: #{tpu_custom_call.1} parent=1 // pred_region
      _
    $region9: #{tpu_custom_call.1} parent=1 // pred_fallthru
      _
    // Predicated region
    $region10: #{tpu_custom_call.1} parent=1 // pred_check
      _
    $region11: #{tpu_custom_call.1} parent=1 // pred_check_branch
      %14 = sbr.rel (0) target = $region13
    $region12: #{tpu_custom_call.1} parent=1 // pred_region
      _
    $region13: #{tpu_custom_call.1} parent=1 // pred_fallthru
      _
    %v16 = vld [vmem:[%s0] sm:$0xf]
    %v17 = vld [vmem:[%s0 + $0x4] sm:$0xf]
    %v18 = vld [vmem:[%s0 + $0x8] sm:$0xf]
    %v19 = vld [vmem:[%s0 + $0xc] sm:$0xf]
    %v20 = vld [vmem:[%s0 + $0x10] sm:$0xf]
    %v21 = vld [vmem:[%s0 + $0x14] sm:$0xf]
    %v22 = vld [vmem:[%s0 + $0x18] sm:$0xf]
    %v23 = vld [vmem:[%s0 + $0x1c] sm:$0xf]
    %v24 = vld [vmem:[%s0 + $0x20] sm:$0xf]
    %v25 = vld [vmem:[%s0 + $0x24] sm:$0xf]
    %v26 = vld [vmem:[%s0 + $0x28] sm:$0xf]
    %v27 = vld [vmem:[%s0 + $0x2c] sm:$0xf]
    %v28 = vld [vmem:[%s0 + $0x30] sm:$0xf]
    %v29 = vld [vmem:[%s0 + $0x34] sm:$0xf]
    %v30 = vld [vmem:[%s0 + $0x38] sm:$0xf]
    %v31 = vld [vmem:[%s0 + $0x3c] sm:$0xf]
    %v32 = vld [vmem:[%s0 + $0x40] sm:$0xf]
    %v33 = vld [vmem:[%s0 + $0x44] sm:$0xf]
    %v34 = vld [vmem:[%s0 + $0x48] sm:$0xf]
    %v35 = vld [vmem:[%s0 + $0x4c] sm:$0xf]
    %v36 = vld [vmem:[%s0 + $0x50] sm:$0xf]
    %v37 = vld [vmem:[%s0 + $0x54] sm:$0xf]
    %v38 = vld [vmem:[%s0 + $0x58] sm:$0xf]
    %v39 = vld [vmem:[%s0 + $0x5c] sm:$0xf]
    %v40 = vld [vmem:[%s0 + $0x60] sm:$0xf]
    %v41 = vld [vmem:[%s0 + $0x64] sm:$0xf]
    %v42 = vld [vmem:[%s0 + $0x68] sm:$0xf]
    %v43 = vld [vmem:[%s0 + $0x6c] sm:$0xf]
    %v44 = vld [vmem:[%s0 + $0x70] sm:$0xf]
    %v45 = vld [vmem:[%s0 + $0x74] sm:$0xf]
    %v46 = vld [vmem:[%s0 + $0x78] sm:$0xf]
    %v47 = vld [vmem:[%s0 + $0x7c] sm:$0xf]
    %v48 = vld [vmem:[%s0 + $0x80] sm:$0xf]
    %v49 = vld [vmem:[%s0 + $0x84] sm:$0xf]
    %v50 = vld [vmem:[%s0 + $0x88] sm:$0xf]
    %v51 = vld [vmem:[%s0 + $0x8c] sm:$0xf]
    %v52 = vld [vmem:[%s0 + $0x90] sm:$0xf]
    %v53 = vld [vmem:[%s0 + $0x94] sm:$0xf]
    %v54 = vld [vmem:[%s0 + $0x98] sm:$0xf]
    %v55 = vld [vmem:[%s0 + $0x9c] sm:$0xf]
    %v56 = vld [vmem:[%s0 + $0xa0] sm:$0xf]
    %v57 = vld [vmem:[%s0 + $0xa4] sm:$0xf]
    %v58 = vld [vmem:[%s0 + $0xa8] sm:$0xf]
    %v59 = vld [vmem:[%s0 + $0xac] sm:$0xf]
    %v60 = vld [vmem:[%s0 + $0xb0] sm:$0xf]
    %v61 = vld [vmem:[%s0 + $0xb4] sm:$0xf]
    %v62 = vld [vmem:[%s0 + $0xb8] sm:$0xf]
    %v63 = vld [vmem:[%s0 + $0xbc] sm:$0xf]
    %v64 = vld [vmem:[%s0 + $0xc0] sm:$0xf]
    %v65 = vld [vmem:[%s0 + $0xc4] sm:$0xf]
    %v66 = vld [vmem:[%s0 + $0xc8] sm:$0xf]
    %v67 = vld [vmem:[%s0 + $0xcc] sm:$0xf]
    %v68 = vld [vmem:[%s0 + $0xd0] sm:$0xf]
    %v69 = vld [vmem:[%s0 + $0xd4] sm:$0xf]
    %v70 = vld [vmem:[%s0 + $0xd8] sm:$0xf]
    %v71 = vld [vmem:[%s0 + $0xdc] sm:$0xf]
    %v72 = vld [vmem:[%s0 + $0xe0] sm:$0xf]
    %v73 = vld [vmem:[%s0 + $0xe4] sm:$0xf]
    %v74 = vld [vmem:[%s0 + $0xe8] sm:$0xf]
    %v75 = vld [vmem:[%s0 + $0xec] sm:$0xf]
    %v76 = vld [vmem:[%s0 + $0xf0] sm:$0xf]
    %v77 = vld [vmem:[%s0 + $0xf4] sm:$0xf]
    %v78 = vld [vmem:[%s0 + $0xf8] sm:$0xf]
    %v79 = vld [vmem:[%s0 + $0xfc] sm:$0xf]
    %v80 = vld [vmem:[%s1] sm:$0xf]
    %v81 = vld [vmem:[%s1 + $0x4] sm:$0xf]
    %v82 = vld [vmem:[%s1 + $0x8] sm:$0xf]
    %v83 = vld [vmem:[%s1 + $0xc] sm:$0xf]
    %v84 = vld [vmem:[%s1 + $0x10] sm:$0x3]
    %v85 = vld [vmem:[%s2] sm:$0x1]
    %v87 = vlaneseq
    %v88 = vshrl.u32 %v87, 7
    %v89 = vsub.s32 0, %v88
    %v90 = vrot.slane %v85, %v89
    %v156 = vunpack.c.l.b16 %v16
    %v157 = vunpack.c.l.b16 %v17
    %v158 = vunpack.c.l.b16 %v18
    %v159 = vunpack.c.l.b16 %v19
    %v160 = vunpack.c.l.b16 %v20
    %v161 = vunpack.c.l.b16 %v21
    %v162 = vunpack.c.l.b16 %v22
    %v163 = vunpack.c.l.b16 %v23
    %v164 = vunpack.c.l.b16 %v24
    %v165 = vunpack.c.l.b16 %v25
    %v166 = vunpack.c.l.b16 %v26
    %v167 = vunpack.c.l.b16 %v27
    %v168 = vunpack.c.l.b16 %v28
    %v169 = vunpack.c.l.b16 %v29
    %v170 = vunpack.c.l.b16 %v30
    %v171 = vunpack.c.l.b16 %v31
    %v172 = vunpack.c.l.b16 %v32
    %v173 = vunpack.c.l.b16 %v33
    %v174 = vunpack.c.l.b16 %v34
    %v175 = vunpack.c.l.b16 %v35
    %v176 = vunpack.c.l.b16 %v36
    %v177 = vunpack.c.l.b16 %v37
    %v178 = vunpack.c.l.b16 %v38
    %v179 = vunpack.c.l.b16 %v39
    %v180 = vunpack.c.l.b16 %v40
    %v181 = vunpack.c.l.b16 %v41
    %v182 = vunpack.c.l.b16 %v42
    %v183 = vunpack.c.l.b16 %v43
    %v184 = vunpack.c.l.b16 %v44
    %v185 = vunpack.c.l.b16 %v45
    %v186 = vunpack.c.l.b16 %v46
    %v187 = vunpack.c.l.b16 %v47
    %v188 = vunpack.c.l.b16 %v48
    %v189 = vunpack.c.l.b16 %v49
    %v190 = vunpack.c.l.b16 %v50
    %v191 = vunpack.c.l.b16 %v51
    %v192 = vunpack.c.l.b16 %v52
    %v193 = vunpack.c.l.b16 %v53
    %v194 = vunpack.c.l.b16 %v54
    %v195 = vunpack.c.l.b16 %v55
    %v196 = vunpack.c.l.b16 %v56
    %v197 = vunpack.c.l.b16 %v57
    %v198 = vunpack.c.l.b16 %v58
    %v199 = vunpack.c.l.b16 %v59
    %v200 = vunpack.c.l.b16 %v60
    %v201 = vunpack.c.l.b16 %v61
    %v202 = vunpack.c.l.b16 %v62
    %v203 = vunpack.c.l.b16 %v63
    %v204 = vunpack.c.l.b16 %v64
    %v205 = vunpack.c.l.b16 %v65
    %v206 = vunpack.c.l.b16 %v66
    %v207 = vunpack.c.l.b16 %v67
    %v208 = vunpack.c.l.b16 %v68
    %v209 = vunpack.c.l.b16 %v69
    %v210 = vunpack.c.l.b16 %v70
    %v211 = vunpack.c.l.b16 %v71
    %v212 = vunpack.c.l.b16 %v72
    %v213 = vunpack.c.l.b16 %v73
    %v214 = vunpack.c.l.b16 %v74
    %v215 = vunpack.c.l.b16 %v75
    %v216 = vunpack.c.l.b16 %v76
    %v217 = vunpack.c.l.b16 %v77
    %v218 = vunpack.c.l.b16 %v78
    %v219 = vunpack.c.l.b16 %v79
    %v220 = vpack.c.b16 %v157, %v156
    %v221 = vpack.c.b16 %v159, %v158
    %v222 = vpack.c.b16 %v161, %v160
    %v223 = vpack.c.b16 %v163, %v162
    %v224 = vpack.c.b16 %v165, %v164
    %v225 = vpack.c.b16 %v167, %v166
    %v226 = vpack.c.b16 %v169, %v168
    %v227 = vpack.c.b16 %v171, %v170
    %v228 = vpack.c.b16 %v173, %v172
    %v229 = vpack.c.b16 %v175, %v174
    %v230 = vpack.c.b16 %v177, %v176
    %v231 = vpack.c.b16 %v179, %v178
    %v232 = vpack.c.b16 %v181, %v180
    %v233 = vpack.c.b16 %v183, %v182
    %v234 = vpack.c.b16 %v185, %v184
    %v235 = vpack.c.b16 %v187, %v186
    %v236 = vpack.c.b16 %v189, %v188
    %v237 = vpack.c.b16 %v191, %v190
    %v238 = vpack.c.b16 %v193, %v192
    %v239 = vpack.c.b16 %v195, %v194
    %v240 = vpack.c.b16 %v197, %v196
    %v241 = vpack.c.b16 %v199, %v198
    %v242 = vpack.c.b16 %v201, %v200
    %v243 = vpack.c.b16 %v203, %v202
    %v244 = vpack.c.b16 %v205, %v204
    %v245 = vpack.c.b16 %v207, %v206
    %v246 = vpack.c.b16 %v209, %v208
    %v247 = vpack.c.b16 %v211, %v210
    %v248 = vpack.c.b16 %v213, %v212
    %v249 = vpack.c.b16 %v215, %v214
    %v250 = vpack.c.b16 %v217, %v216
    %v251 = vpack.c.b16 %v219, %v218
    %v257 = vunpack.c.l.b16 %v80
    %v258 = vunpack.c.l.b16 %v81
    %v259 = vunpack.c.l.b16 %v82
    %v260 = vunpack.c.l.b16 %v83
    %v261 = vunpack.c.l.b16 %v84
    %v262 = vpack.c.b16 %v258, %v257
    %v263 = vpack.c.b16 %v260, %v259
    %v264 = vpack.c.b16 %v261, %v261
    %vm267 = vcmask 293888
    %v269 = vsel %vm267, %v220, 0
    %v272 = vsel %vm267, %v221, 0
    %v275 = vsel %vm267, %v222, 0
    %v278 = vsel %vm267, %v223, 0
    %v281 = vsel %vm267, %v224, 0
    %v284 = vsel %vm267, %v225, 0
    %v287 = vsel %vm267, %v226, 0
    %v290 = vsel %vm267, %v227, 0
    %v293 = vsel %vm267, %v228, 0
    %v296 = vsel %vm267, %v229, 0
    %v299 = vsel %vm267, %v230, 0
    %v302 = vsel %vm267, %v231, 0
    %v305 = vsel %vm267, %v232, 0
    %v308 = vsel %vm267, %v233, 0
    %v311 = vsel %vm267, %v234, 0
    %v314 = vsel %vm267, %v235, 0
    %v317 = vsel %vm267, %v236, 0
    %v320 = vsel %vm267, %v237, 0
    %v323 = vsel %vm267, %v238, 0
    %v326 = vsel %vm267, %v239, 0
    %v329 = vsel %vm267, %v240, 0
    %v332 = vsel %vm267, %v241, 0
    %v335 = vsel %vm267, %v242, 0
    %v338 = vsel %vm267, %v243, 0
    %v341 = vsel %vm267, %v244, 0
    %v344 = vsel %vm267, %v245, 0
    %v347 = vsel %vm267, %v246, 0
    %v350 = vsel %vm267, %v247, 0
    %v353 = vsel %vm267, %v248, 0
    %v356 = vsel %vm267, %v249, 0
    %v359 = vsel %vm267, %v250, 0
    %v362 = vsel %vm267, %v251, 0
    %vm364 = vcmask 1041408
    %v366 = vsel %vm364, %v264, 0
    %368 = vmatprep.subr.bf16.mxu0 0
    %369 = vmatpush1.bf16.msra.mxu0 %v262
    %370 = vmatprep.subr.bf16.mxu0 0
    %371 = vmatpush1.bf16.msra.mxu0 %v263
    %372 = vmatprep.subr.bf16.mxu0 0
    %373 = vmatpush1.bf16.msra.mxu0 %v366
    %374 = vmatprep.subr.bf16.mxu0 0
    %375 = vmatpush1.bf16.msra.mxu0 0
    %376 = vmatprep.subr.bf16.mxu0 0
    %377 = vmatpush1.bf16.msra.mxu0 0
    %378 = vmatprep.subr.bf16.mxu0 0
    %379 = vmatpush1.bf16.msra.mxu0 0
    %380 = vmatprep.subr.bf16.mxu0 0
    %381 = vmatpush1.bf16.msra.mxu0 0
    %382 = vmatprep.subr.bf16.mxu0 0
    %383 = vmatpush1.bf16.msra.mxu0 0
    %384 = vmatprep.subr.bf16.mxu0 0
    %385 = vmatpush1.bf16.msra.mxu0 0
    %386 = vmatprep.subr.bf16.mxu0 0
    %387 = vmatpush1.bf16.msra.mxu0 0
    %388 = vmatprep.subr.bf16.mxu0 0
    %389 = vmatpush1.bf16.msra.mxu0 0
    %390 = vmatprep.subr.bf16.mxu0 0
    %391 = vmatpush1.bf16.msra.mxu0 0
    %392 = vmatprep.subr.bf16.mxu0 0
    %393 = vmatpush1.bf16.msra.mxu0 0
    %394 = vmatprep.subr.bf16.mxu0 0
    %395 = vmatpush1.bf16.msra.mxu0 0
    %396 = vmatprep.subr.bf16.mxu0 0
    %397 = vmatpush1.bf16.msra.mxu0 0
    %398 = vmatprep.subr.bf16.mxu0 0
    %399 = vmatpush1.bf16.msra.mxu0 0
    %400 = vmatprep.mubr.bf16.mxu0 0
    %401 = vmatmul.mubr.bf16.gmra.mrb[0].mxu0 %v269
    %v402 = vpop.f32.mrb[0].mxu0
    %v403 = vadd.f32 %v90, %v402
    %v404 = vpop.f32.mrb[0].mxu0
    %v405 = vpop.f32.mrb[0].mxu0
    %v406 = vadd.f32 %v90, %v405
    %v407 = vpop.f32.mrb[0].mxu0
    %408 = vmatprep.mubr.bf16.mxu0 0
    %409 = vmatmul.mubr.bf16.gmra.mrb[0].mxu0 %v272
    %v410 = vpop.f32.mrb[0].mxu0
    %v411 = vadd.f32 %v90, %v410
    %v412 = vpop.f32.mrb[0].mxu0
    %v413 = vpop.f32.mrb[0].mxu0
    %v414 = vadd.f32 %v90, %v413
    %v415 = vpop.f32.mrb[0].mxu0
    %416 = vmatprep.mubr.bf16.mxu0 0
    %417 = vmatmul.mubr.bf16.gmra.mrb[0].mxu0 %v275
    %v418 = vpop.f32.mrb[0].mxu0
    %v419 = vadd.f32 %v90, %v418
    %v420 = vpop.f32.mrb[0].mxu0
    %v421 = vpop.f32.mrb[0].mxu0
    %v422 = vadd.f32 %v90, %v421
    %v423 = vpop.f32.mrb[0].mxu0
    %424 = vmatprep.mubr.bf16.mxu0 0
    %425 = vmatmul.mubr.bf16.gmra.mrb[0].mxu0 %v278
    %v426 = vpop.f32.mrb[0].mxu0
    %v427 = vadd.f32 %v90, %v426
    %v428 = vpop.f32.mrb[0].mxu0
    %v429 = vpop.f32.mrb[0].mxu0
    %v430 = vadd.f32 %v90, %v429
    %v431 = vpop.f32.mrb[0].mxu0
    %432 = vmatprep.mubr.bf16.mxu0 0
    %433 = vmatmul.mubr.bf16.gmra.mrb[0].mxu0 %v281
    %v434 = vpop.f32.mrb[0].mxu0
    %v435 = vadd.f32 %v90, %v434
    %v436 = vpop.f32.mrb[0].mxu0
    %v437 = vpop.f32.mrb[0].mxu0
    %v438 = vadd.f32 %v90, %v437
    %v439 = vpop.f32.mrb[0].mxu0
    %440 = vmatprep.mubr.bf16.mxu0 0
    %441 = vmatmul.mubr.bf16.gmra.mrb[0].mxu0 %v284
    %v442 = vpop.f32.mrb[0].mxu0
    %v443 = vadd.f32 %v90, %v442
    %v444 = vpop.f32.mrb[0].mxu0
    %v445 = vpop.f32.mrb[0].mxu0
    %v446 = vadd.f32 %v90, %v445
    %v447 = vpop.f32.mrb[0].mxu0
    %448 = vmatprep.mubr.bf16.mxu0 0
    %449 = vmatmul.mubr.bf16.gmra.mrb[0].mxu0 %v287
    %v450 = vpop.f32.mrb[0].mxu0
    %v451 = vadd.f32 %v90, %v450
    %v452 = vpop.f32.mrb[0].mxu0
    %v453 = vpop.f32.mrb[0].mxu0
    %v454 = vadd.f32 %v90, %v453
    %v455 = vpop.f32.mrb[0].mxu0
    %456 = vmatprep.mubr.bf16.mxu0 0
    %457 = vmatmul.mubr.bf16.gmra.mrb[0].mxu0 %v290
    %v458 = vpop.f32.mrb[0].mxu0
    %v459 = vadd.f32 %v90, %v458
    %v460 = vpop.f32.mrb[0].mxu0
    %v461 = vpop.f32.mrb[0].mxu0
    %v462 = vadd.f32 %v90, %v461
    %v463 = vpop.f32.mrb[0].mxu0
    %464 = vmatprep.mubr.bf16.mxu0 0
    %465 = vmatmul.mubr.bf16.gmra.mrb[0].mxu0 %v293
    %v466 = vpop.f32.mrb[0].mxu0
    %v467 = vadd.f32 %v90, %v466
    %v468 = vpop.f32.mrb[0].mxu0
    %v469 = vpop.f32.mrb[0].mxu0
    %v470 = vadd.f32 %v90, %v469
    %v471 = vpop.f32.mrb[0].mxu0
    %472 = vmatprep.mubr.bf16.mxu0 0
    %473 = vmatmul.mubr.bf16.gmra.mrb[0].mxu0 %v296
    %v474 = vpop.f32.mrb[0].mxu0
    %v475 = vadd.f32 %v90, %v474
    %v476 = vpop.f32.mrb[0].mxu0
    %v477 = vpop.f32.mrb[0].mxu0
    %v478 = vadd.f32 %v90, %v477
    %v479 = vpop.f32.mrb[0].mxu0
    %480 = vmatprep.mubr.bf16.mxu0 0
    %481 = vmatmul.mubr.bf16.gmra.mrb[0].mxu0 %v299
    %v482 = vpop.f32.mrb[0].mxu0
    %v483 = vadd.f32 %v90, %v482
    %v484 = vpop.f32.mrb[0].mxu0
    %v485 = vpop.f32.mrb[0].mxu0
    %v486 = vadd.f32 %v90, %v485
    %v487 = vpop.f32.mrb[0].mxu0
    %488 = vmatprep.mubr.bf16.mxu0 0
    %489 = vmatmul.mubr.bf16.gmra.mrb[0].mxu0 %v302
    %v490 = vpop.f32.mrb[0].mxu0
    %v491 = vadd.f32 %v90, %v490
    %v492 = vpop.f32.mrb[0].mxu0
    %v493 = vpop.f32.mrb[0].mxu0
    %v494 = vadd.f32 %v90, %v493
    %v495 = vpop.f32.mrb[0].mxu0
    %496 = vmatprep.mubr.bf16.mxu0 0
    %497 = vmatmul.mubr.bf16.gmra.mrb[0].mxu0 %v305
    %v498 = vpop.f32.mrb[0].mxu0
    %v499 = vadd.f32 %v90, %v498
    %v500 = vpop.f32.mrb[0].mxu0
    %v501 = vpop.f32.mrb[0].mxu0
    %v502 = vadd.f32 %v90, %v501
    %v503 = vpop.f32.mrb[0].mxu0
    %504 = vmatprep.mubr.bf16.mxu0 0
    %505 = vmatmul.mubr.bf16.gmra.mrb[0].mxu0 %v308
    %v506 = vpop.f32.mrb[0].mxu0
    %v507 = vadd.f32 %v90, %v506
    %v508 = vpop.f32.mrb[0].mxu0
    %v509 = vpop.f32.mrb[0].mxu0
    %v510 = vadd.f32 %v90, %v509
    %v511 = vpop.f32.mrb[0].mxu0
    %512 = vmatprep.mubr.bf16.mxu0 0
    %513 = vmatmul.mubr.bf16.gmra.mrb[0].mxu0 %v311
    %v514 = vpop.f32.mrb[0].mxu0
    %v515 = vadd.f32 %v90, %v514
    %v516 = vpop.f32.mrb[0].mxu0
    %v517 = vpop.f32.mrb[0].mxu0
    %v518 = vadd.f32 %v90, %v517
    %v519 = vpop.f32.mrb[0].mxu0
    %520 = vmatprep.mubr.bf16.mxu0 0
    %521 = vmatmul.mubr.bf16.gmra.mrb[0].mxu0 %v314
    %v522 = vpop.f32.mrb[0].mxu0
    %v523 = vadd.f32 %v90, %v522
    %v524 = vpop.f32.mrb[0].mxu0
    %v525 = vpop.f32.mrb[0].mxu0
    %v526 = vadd.f32 %v90, %v525
    %v527 = vpop.f32.mrb[0].mxu0
    %528 = vmatprep.mubr.bf16.mxu0 0
    %529 = vmatmul.mubr.bf16.gmra.mrb[0].mxu0 %v317
    %v530 = vpop.f32.mrb[0].mxu0
    %v531 = vadd.f32 %v90, %v530
    %v532 = vpop.f32.mrb[0].mxu0
    %v533 = vpop.f32.mrb[0].mxu0
    %v534 = vadd.f32 %v90, %v533
    %v535 = vpop.f32.mrb[0].mxu0
    %536 = vmatprep.mubr.bf16.mxu0 0
    %537 = vmatmul.mubr.bf16.gmra.mrb[0].mxu0 %v320
    %v538 = vpop.f32.mrb[0].mxu0
    %v539 = vadd.f32 %v90, %v538
    %v540 = vpop.f32.mrb[0].mxu0
    %v541 = vpop.f32.mrb[0].mxu0
    %v542 = vadd.f32 %v90, %v541
    %v543 = vpop.f32.mrb[0].mxu0
    %544 = vmatprep.mubr.bf16.mxu0 0
    %545 = vmatmul.mubr.bf16.gmra.mrb[0].mxu0 %v323
    %v546 = vpop.f32.mrb[0].mxu0
    %v547 = vadd.f32 %v90, %v546
    %v548 = vpop.f32.mrb[0].mxu0
    %v549 = vpop.f32.mrb[0].mxu0
    %v550 = vadd.f32 %v90, %v549
    %v551 = vpop.f32.mrb[0].mxu0
    %552 = vmatprep.mubr.bf16.mxu0 0
    %553 = vmatmul.mubr.bf16.gmra.mrb[0].mxu0 %v326
    %v554 = vpop.f32.mrb[0].mxu0
    %v555 = vadd.f32 %v90, %v554
    %v556 = vpop.f32.mrb[0].mxu0
    %v557 = vpop.f32.mrb[0].mxu0
    %v558 = vadd.f32 %v90, %v557
    %v559 = vpop.f32.mrb[0].mxu0
    %560 = vmatprep.mubr.bf16.mxu0 0
    %561 = vmatmul.mubr.bf16.gmra.mrb[0].mxu0 %v329
    %v562 = vpop.f32.mrb[0].mxu0
    %v563 = vadd.f32 %v90, %v562
    %v564 = vpop.f32.mrb[0].mxu0
    %v565 = vpop.f32.mrb[0].mxu0
    %v566 = vadd.f32 %v90, %v565
    %v567 = vpop.f32.mrb[0].mxu0
    %568 = vmatprep.mubr.bf16.mxu0 0
    %569 = vmatmul.mubr.bf16.gmra.mrb[0].mxu0 %v332
    %v570 = vpop.f32.mrb[0].mxu0
    %v571 = vadd.f32 %v90, %v570
    %v572 = vpop.f32.mrb[0].mxu0
    %v573 = vpop.f32.mrb[0].mxu0
    %v574 = vadd.f32 %v90, %v573
    %v575 = vpop.f32.mrb[0].mxu0
    %576 = vmatprep.mubr.bf16.mxu0 0
    %577 = vmatmul.mubr.bf16.gmra.mrb[0].mxu0 %v335
    %v578 = vpop.f32.mrb[0].mxu0
    %v579 = vadd.f32 %v90, %v578
    %v580 = vpop.f32.mrb[0].mxu0
    %v581 = vpop.f32.mrb[0].mxu0
    %v582 = vadd.f32 %v90, %v581
    %v583 = vpop.f32.mrb[0].mxu0
    %584 = vmatprep.mubr.bf16.mxu0 0
    %585 = vmatmul.mubr.bf16.gmra.mrb[0].mxu0 %v338
    %v586 = vpop.f32.mrb[0].mxu0
    %v587 = vadd.f32 %v90, %v586
    %v588 = vpop.f32.mrb[0].mxu0
    %v589 = vpop.f32.mrb[0].mxu0
    %v590 = vadd.f32 %v90, %v589
    %v591 = vpop.f32.mrb[0].mxu0
    %592 = vmatprep.mubr.bf16.mxu0 0
    %593 = vmatmul.mubr.bf16.gmra.mrb[0].mxu0 %v341
    %v594 = vpop.f32.mrb[0].mxu0
    %v595 = vadd.f32 %v90, %v594
    %v596 = vpop.f32.mrb[0].mxu0
    %v597 = vpop.f32.mrb[0].mxu0
    %v598 = vadd.f32 %v90, %v597
    %v599 = vpop.f32.mrb[0].mxu0
    %600 = vmatprep.mubr.bf16.mxu0 0
    %601 = vmatmul.mubr.bf16.gmra.mrb[0].mxu0 %v344
    %v602 = vpop.f32.mrb[0].mxu0
    %v603 = vadd.f32 %v90, %v602
    %v604 = vpop.f32.mrb[0].mxu0
    %v605 = vpop.f32.mrb[0].mxu0
    %v606 = vadd.f32 %v90, %v605
    %v607 = vpop.f32.mrb[0].mxu0
    %608 = vmatprep.mubr.bf16.mxu0 0
    %609 = vmatmul.mubr.bf16.gmra.mrb[0].mxu0 %v347
    %v610 = vpop.f32.mrb[0].mxu0
    %v611 = vadd.f32 %v90, %v610
    %v612 = vpop.f32.mrb[0].mxu0
    %v613 = vpop.f32.mrb[0].mxu0
    %v614 = vadd.f32 %v90, %v613
    %v615 = vpop.f32.mrb[0].mxu0
    %616 = vmatprep.mubr.bf16.mxu0 0
    %617 = vmatmul.mubr.bf16.gmra.mrb[0].mxu0 %v350
    %v618 = vpop.f32.mrb[0].mxu0
    %v619 = vadd.f32 %v90, %v618
    %v620 = vpop.f32.mrb[0].mxu0
    %v621 = vpop.f32.mrb[0].mxu0
    %v622 = vadd.f32 %v90, %v621
    %v623 = vpop.f32.mrb[0].mxu0
    %624 = vmatprep.mubr.bf16.mxu0 0
    %625 = vmatmul.mubr.bf16.gmra.mrb[0].mxu0 %v353
    %v626 = vpop.f32.mrb[0].mxu0
    %v627 = vadd.f32 %v90, %v626
    %v628 = vpop.f32.mrb[0].mxu0
    %v629 = vpop.f32.mrb[0].mxu0
    %v630 = vadd.f32 %v90, %v629
    %v631 = vpop.f32.mrb[0].mxu0
    %632 = vmatprep.mubr.bf16.mxu0 0
    %633 = vmatmul.mubr.bf16.gmra.mrb[0].mxu0 %v356
    %v634 = vpop.f32.mrb[0].mxu0
    %v635 = vadd.f32 %v90, %v634
    %v636 = vpop.f32.mrb[0].mxu0
    %v637 = vpop.f32.mrb[0].mxu0
    %v638 = vadd.f32 %v90, %v637
    %v639 = vpop.f32.mrb[0].mxu0
    %640 = vmatprep.mubr.bf16.mxu0 0
    %641 = vmatmul.mubr.bf16.gmra.mrb[0].mxu0 %v359
    %v642 = vpop.f32.mrb[0].mxu0
    %v643 = vadd.f32 %v90, %v642
    %v644 = vpop.f32.mrb[0].mxu0
    %v645 = vpop.f32.mrb[0].mxu0
    %v646 = vadd.f32 %v90, %v645
    %v647 = vpop.f32.mrb[0].mxu0
    %648 = vmatprep.mubr.bf16.mxu0 0
    %649 = vmatmul.mubr.bf16.gmra.mrb[0].mxu0 %v362
    %v650 = vpop.f32.mrb[0].mxu0
    %v651 = vadd.f32 %v90, %v650
    %v652 = vpop.f32.mrb[0].mxu0
    %v653 = vpop.f32.mrb[0].mxu0
    %v654 = vadd.f32 %v90, %v653
    %v655 = vpop.f32.mrb[0].mxu0
    %656 = vdwg.mxu0
    %v657 = vmax.f32 %v403, 0.0
    %v658 = vmax.f32 %v406, 0.0
    %v659 = vmax.f32 %v411, 0.0
    %v660 = vmax.f32 %v414, 0.0
    %v661 = vmax.f32 %v419, 0.0
    %v662 = vmax.f32 %v422, 0.0
    %v663 = vmax.f32 %v427, 0.0
    %v664 = vmax.f32 %v430, 0.0
    %v665 = vmax.f32 %v435, 0.0
    %v666 = vmax.f32 %v438, 0.0
    %v667 = vmax.f32 %v443, 0.0
    %v668 = vmax.f32 %v446, 0.0
    %v669 = vmax.f32 %v451, 0.0
    %v670 = vmax.f32 %v454, 0.0
    %v671 = vmax.f32 %v459, 0.0
    %v672 = vmax.f32 %v462, 0.0
    %v673 = vmax.f32 %v467, 0.0
    %v674 = vmax.f32 %v470, 0.0
    %v675 = vmax.f32 %v475, 0.0
    %v676 = vmax.f32 %v478, 0.0
    %v677 = vmax.f32 %v483, 0.0
    %v678 = vmax.f32 %v486, 0.0
    %v679 = vmax.f32 %v491, 0.0
    %v680 = vmax.f32 %v494, 0.0
    %v681 = vmax.f32 %v499, 0.0
    %v682 = vmax.f32 %v502, 0.0
    %v683 = vmax.f32 %v507, 0.0
    %v684 = vmax.f32 %v510, 0.0
    %v685 = vmax.f32 %v515, 0.0
    %v686 = vmax.f32 %v518, 0.0
    %v687 = vmax.f32 %v523, 0.0
    %v688 = vmax.f32 %v526, 0.0
    %v689 = vmax.f32 %v531, 0.0
    %v690 = vmax.f32 %v534, 0.0
    %v691 = vmax.f32 %v539, 0.0
    %v692 = vmax.f32 %v542, 0.0
    %v693 = vmax.f32 %v547, 0.0
    %v694 = vmax.f32 %v550, 0.0
    %v695 = vmax.f32 %v555, 0.0
    %v696 = vmax.f32 %v558, 0.0
    %v697 = vmax.f32 %v563, 0.0
    %v698 = vmax.f32 %v566, 0.0
    %v699 = vmax.f32 %v571, 0.0
    %v700 = vmax.f32 %v574, 0.0
    %v701 = vmax.f32 %v579, 0.0
    %v702 = vmax.f32 %v582, 0.0
    %v703 = vmax.f32 %v587, 0.0
    %v704 = vmax.f32 %v590, 0.0
    %v705 = vmax.f32 %v595, 0.0
    %v706 = vmax.f32 %v598, 0.0
    %v707 = vmax.f32 %v603, 0.0
    %v708 = vmax.f32 %v606, 0.0
    %v709 = vmax.f32 %v611, 0.0
    %v710 = vmax.f32 %v614, 0.0
    %v711 = vmax.f32 %v619, 0.0
    %v712 = vmax.f32 %v622, 0.0
    %v713 = vmax.f32 %v627, 0.0
    %v714 = vmax.f32 %v630, 0.0
    %v715 = vmax.f32 %v635, 0.0
    %v716 = vmax.f32 %v638, 0.0
    %v717 = vmax.f32 %v643, 0.0
    %v718 = vmax.f32 %v646, 0.0
    %v719 = vmax.f32 %v651, 0.0
    %v720 = vmax.f32 %v654, 0.0
    %v721 = vpack.c.bf16 %v658, %v657
    %v722 = vpack.c.bf16 %v660, %v659
    %v723 = vpack.c.bf16 %v662, %v661
    %v724 = vpack.c.bf16 %v664, %v663
    %v725 = vpack.c.bf16 %v666, %v665
    %v726 = vpack.c.bf16 %v668, %v667
    %v727 = vpack.c.bf16 %v670, %v669
    %v728 = vpack.c.bf16 %v672, %v671
    %v729 = vpack.c.bf16 %v674, %v673
    %v730 = vpack.c.bf16 %v676, %v675
    %v731 = vpack.c.bf16 %v678, %v677
    %v732 = vpack.c.bf16 %v680, %v679
    %v733 = vpack.c.bf16 %v682, %v681
    %v734 = vpack.c.bf16 %v684, %v683
    %v735 = vpack.c.bf16 %v686, %v685
    %v736 = vpack.c.bf16 %v688, %v687
    %v737 = vpack.c.bf16 %v690, %v689
    %v738 = vpack.c.bf16 %v692, %v691
    %v739 = vpack.c.bf16 %v694, %v693
    %v740 = vpack.c.bf16 %v696, %v695
    %v741 = vpack.c.bf16 %v698, %v697
    %v742 = vpack.c.bf16 %v700, %v699
    %v743 = vpack.c.bf16 %v702, %v701
    %v744 = vpack.c.bf16 %v704, %v703
    %v745 = vpack.c.bf16 %v706, %v705
    %v746 = vpack.c.bf16 %v708, %v707
    %v747 = vpack.c.bf16 %v710, %v709
    %v748 = vpack.c.bf16 %v712, %v711
    %v749 = vpack.c.bf16 %v714, %v713
    %v750 = vpack.c.bf16 %v716, %v715
    %v751 = vpack.c.bf16 %v718, %v717
    %v752 = vpack.c.bf16 %v720, %v719
    %v785 = vunpack.c.l.b16 %v721
    %v786 = vunpack.c.h.b16 %v721
    %v787 = vunpack.c.l.b16 %v722
    %v788 = vunpack.c.h.b16 %v722
    %v789 = vunpack.c.l.b16 %v723
    %v790 = vunpack.c.h.b16 %v723
    %v791 = vunpack.c.l.b16 %v724
    %v792 = vunpack.c.h.b16 %v724
    %v793 = vunpack.c.l.b16 %v725
    %v794 = vunpack.c.h.b16 %v725
    %v795 = vunpack.c.l.b16 %v726
    %v796 = vunpack.c.h.b16 %v726
    %v797 = vunpack.c.l.b16 %v727
    %v798 = vunpack.c.h.b16 %v727
    %v799 = vunpack.c.l.b16 %v728
    %v800 = vunpack.c.h.b16 %v728
    %v801 = vunpack.c.l.b16 %v729
    %v802 = vunpack.c.h.b16 %v729
    %v803 = vunpack.c.l.b16 %v730
    %v804 = vunpack.c.h.b16 %v730
    %v805 = vunpack.c.l.b16 %v731
    %v806 = vunpack.c.h.b16 %v731
    %v807 = vunpack.c.l.b16 %v732
    %v808 = vunpack.c.h.b16 %v732
    %v809 = vunpack.c.l.b16 %v733
    %v810 = vunpack.c.h.b16 %v733
    %v811 = vunpack.c.l.b16 %v734
    %v812 = vunpack.c.h.b16 %v734
    %v813 = vunpack.c.l.b16 %v735
    %v814 = vunpack.c.h.b16 %v735
    %v815 = vunpack.c.l.b16 %v736
    %v816 = vunpack.c.h.b16 %v736
    %v817 = vunpack.c.l.b16 %v737
    %v818 = vunpack.c.h.b16 %v737
    %v819 = vunpack.c.l.b16 %v738
    %v820 = vunpack.c.h.b16 %v738
    %v821 = vunpack.c.l.b16 %v739
    %v822 = vunpack.c.h.b16 %v739
    %v823 = vunpack.c.l.b16 %v740
    %v824 = vunpack.c.h.b16 %v740
    %v825 = vunpack.c.l.b16 %v741
    %v826 = vunpack.c.h.b16 %v741
    %v827 = vunpack.c.l.b16 %v742
    %v828 = vunpack.c.h.b16 %v742
    %v829 = vunpack.c.l.b16 %v743
    %v830 = vunpack.c.h.b16 %v743
    %v831 = vunpack.c.l.b16 %v744
    %v832 = vunpack.c.h.b16 %v744
    %v833 = vunpack.c.l.b16 %v745
    %v834 = vunpack.c.h.b16 %v745
    %v835 = vunpack.c.l.b16 %v746
    %v836 = vunpack.c.h.b16 %v746
    %v837 = vunpack.c.l.b16 %v747
    %v838 = vunpack.c.h.b16 %v747
    %v839 = vunpack.c.l.b16 %v748
    %v840 = vunpack.c.h.b16 %v748
    %v841 = vunpack.c.l.b16 %v749
    %v842 = vunpack.c.h.b16 %v749
    %v843 = vunpack.c.l.b16 %v750
    %v844 = vunpack.c.h.b16 %v750
    %v845 = vunpack.c.l.b16 %v751
    %v846 = vunpack.c.h.b16 %v751
    %v847 = vunpack.c.l.b16 %v752
    %v848 = vunpack.c.h.b16 %v752
    %v849 = vpack.c.b16 %v785, %v785
    %v850 = vpack.c.b16 %v786, %v786
    %v851 = vpack.c.b16 %v787, %v787
    %v852 = vpack.c.b16 %v788, %v788
    %v853 = vpack.c.b16 %v789, %v789
    %v854 = vpack.c.b16 %v790, %v790
    %v855 = vpack.c.b16 %v791, %v791
    %v856 = vpack.c.b16 %v792, %v792
    %v857 = vpack.c.b16 %v793, %v793
    %v858 = vpack.c.b16 %v794, %v794
    %v859 = vpack.c.b16 %v795, %v795
    %v860 = vpack.c.b16 %v796, %v796
    %v861 = vpack.c.b16 %v797, %v797
    %v862 = vpack.c.b16 %v798, %v798
    %v863 = vpack.c.b16 %v799, %v799
    %v864 = vpack.c.b16 %v800, %v800
    %v865 = vpack.c.b16 %v801, %v801
    %v866 = vpack.c.b16 %v802, %v802
    %v867 = vpack.c.b16 %v803, %v803
    %v868 = vpack.c.b16 %v804, %v804
    %v869 = vpack.c.b16 %v805, %v805
    %v870 = vpack.c.b16 %v806, %v806
    %v871 = vpack.c.b16 %v807, %v807
    %v872 = vpack.c.b16 %v808, %v808
    %v873 = vpack.c.b16 %v809, %v809
    %v874 = vpack.c.b16 %v810, %v810
    %v875 = vpack.c.b16 %v811, %v811
    %v876 = vpack.c.b16 %v812, %v812
    %v877 = vpack.c.b16 %v813, %v813
    %v878 = vpack.c.b16 %v814, %v814
    %v879 = vpack.c.b16 %v815, %v815
    %v880 = vpack.c.b16 %v816, %v816
    %v881 = vpack.c.b16 %v817, %v817
    %v882 = vpack.c.b16 %v818, %v818
    %v883 = vpack.c.b16 %v819, %v819
    %v884 = vpack.c.b16 %v820, %v820
    %v885 = vpack.c.b16 %v821, %v821
    %v886 = vpack.c.b16 %v822, %v822
    %v887 = vpack.c.b16 %v823, %v823
    %v888 = vpack.c.b16 %v824, %v824
    %v889 = vpack.c.b16 %v825, %v825
    %v890 = vpack.c.b16 %v826, %v826
    %v891 = vpack.c.b16 %v827, %v827
    %v892 = vpack.c.b16 %v828, %v828
    %v893 = vpack.c.b16 %v829, %v829
    %v894 = vpack.c.b16 %v830, %v830
    %v895 = vpack.c.b16 %v831, %v831
    %v896 = vpack.c.b16 %v832, %v832
    %v897 = vpack.c.b16 %v833, %v833
    %v898 = vpack.c.b16 %v834, %v834
    %v899 = vpack.c.b16 %v835, %v835
    %v900 = vpack.c.b16 %v836, %v836
    %v901 = vpack.c.b16 %v837, %v837
    %v902 = vpack.c.b16 %v838, %v838
    %v903 = vpack.c.b16 %v839, %v839
    %v904 = vpack.c.b16 %v840, %v840
    %v905 = vpack.c.b16 %v841, %v841
    %v906 = vpack.c.b16 %v842, %v842
    %v907 = vpack.c.b16 %v843, %v843
    %v908 = vpack.c.b16 %v844, %v844
    %v909 = vpack.c.b16 %v845, %v845
    %v910 = vpack.c.b16 %v846, %v846
    %v911 = vpack.c.b16 %v847, %v847
    %v912 = vpack.c.b16 %v848, %v848
    %977 = vst [vmem:[#allocation2] sm:$0xf] %v849
    %978 = vst [vmem:[#allocation2 + $0x4] sm:$0xf] %v850
    %979 = vst [vmem:[#allocation2 + $0x8] sm:$0xf] %v851
    %980 = vst [vmem:[#allocation2 + $0xc] sm:$0xf] %v852
    %981 = vst [vmem:[#allocation2 + $0x10] sm:$0xf] %v853
    %982 = vst [vmem:[#allocation2 + $0x14] sm:$0xf] %v854
    %983 = vst [vmem:[#allocation2 + $0x18] sm:$0xf] %v855
    %984 = vst [vmem:[#allocation2 + $0x1c] sm:$0xf] %v856
    %985 = vst [vmem:[#allocation2 + $0x20] sm:$0xf] %v857
    %986 = vst [vmem:[#allocation2 + $0x24] sm:$0xf] %v858
    %987 = vst [vmem:[#allocation2 + $0x28] sm:$0xf] %v859
    %988 = vst [vmem:[#allocation2 + $0x2c] sm:$0xf] %v860
    %989 = vst [vmem:[#allocation2 + $0x30] sm:$0xf] %v861
    %990 = vst [vmem:[#allocation2 + $0x34] sm:$0xf] %v862
    %991 = vst [vmem:[#allocation2 + $0x38] sm:$0xf] %v863
    %992 = vst [vmem:[#allocation2 + $0x3c] sm:$0xf] %v864
    %993 = vst [vmem:[#allocation2 + $0x40] sm:$0xf] %v865
    %994 = vst [vmem:[#allocation2 + $0x44] sm:$0xf] %v866
    %995 = vst [vmem:[#allocation2 + $0x48] sm:$0xf] %v867
    %996 = vst [vmem:[#allocation2 + $0x4c] sm:$0xf] %v868
    %997 = vst [vmem:[#allocation2 + $0x50] sm:$0xf] %v869
    %998 = vst [vmem:[#allocation2 + $0x54] sm:$0xf] %v870
    %999 = vst [vmem:[#allocation2 + $0x58] sm:$0xf] %v871
    %1000 = vst [vmem:[#allocation2 + $0x5c] sm:$0xf] %v872
    %1001 = vst [vmem:[#allocation2 + $0x60] sm:$0xf] %v873
    %1002 = vst [vmem:[#allocation2 + $0x64] sm:$0xf] %v874
    %1003 = vst [vmem:[#allocation2 + $0x68] sm:$0xf] %v875
    %1004 = vst [vmem:[#allocation2 + $0x6c] sm:$0xf] %v876
    %1005 = vst [vmem:[#allocation2 + $0x70] sm:$0xf] %v877
    %1006 = vst [vmem:[#allocation2 + $0x74] sm:$0xf] %v878
    %1007 = vst [vmem:[#allocation2 + $0x78] sm:$0xf] %v879
    %1008 = vst [vmem:[#allocation2 + $0x7c] sm:$0xf] %v880
    %1009 = vst [vmem:[#allocation2 + $0x80] sm:$0xf] %v881
    %1010 = vst [vmem:[#allocation2 + $0x84] sm:$0xf] %v882
    %1011 = vst [vmem:[#allocation2 + $0x88] sm:$0xf] %v883
    %1012 = vst [vmem:[#allocation2 + $0x8c] sm:$0xf] %v884
    %1013 = vst [vmem:[#allocation2 + $0x90] sm:$0xf] %v885
    %1014 = vst [vmem:[#allocation2 + $0x94] sm:$0xf] %v886
    %1015 = vst [vmem:[#allocation2 + $0x98] sm:$0xf] %v887
    %1016 = vst [vmem:[#allocation2 + $0x9c] sm:$0xf] %v888
    %1017 = vst [vmem:[#allocation2 + $0xa0] sm:$0xf] %v889
    %1018 = vst [vmem:[#allocation2 + $0xa4] sm:$0xf] %v890
    %1019 = vst [vmem:[#allocation2 + $0xa8] sm:$0xf] %v891
    %1020 = vst [vmem:[#allocation2 + $0xac] sm:$0xf] %v892
    %1021 = vst [vmem:[#allocation2 + $0xb0] sm:$0xf] %v893
    %1022 = vst [vmem:[#allocation2 + $0xb4] sm:$0xf] %v894
    %1023 = vst [vmem:[#allocation2 + $0xb8] sm:$0xf] %v895
    %1024 = vst [vmem:[#allocation2 + $0xbc] sm:$0xf] %v896
    %1025 = vst [vmem:[#allocation2 + $0xc0] sm:$0xf] %v897
    %1026 = vst [vmem:[#allocation2 + $0xc4] sm:$0xf] %v898
    %1027 = vst [vmem:[#allocation2 + $0xc8] sm:$0xf] %v899
    %1028 = vst [vmem:[#allocation2 + $0xcc] sm:$0xf] %v900
    %1029 = vst [vmem:[#allocation2 + $0xd0] sm:$0xf] %v901
    %1030 = vst [vmem:[#allocation2 + $0xd4] sm:$0xf] %v902
    %1031 = vst [vmem:[#allocation2 + $0xd8] sm:$0xf] %v903
    %1032 = vst [vmem:[#allocation2 + $0xdc] sm:$0xf] %v904
    %1033 = vst [vmem:[#allocation2 + $0xe0] sm:$0xf] %v905
    %1034 = vst [vmem:[#allocation2 + $0xe4] sm:$0xf] %v906
    %1035 = vst [vmem:[#allocation2 + $0xe8] sm:$0xf] %v907
    %1036 = vst [vmem:[#allocation2 + $0xec] sm:$0xf] %v908
    %1037 = vst [vmem:[#allocation2 + $0xf0] sm:$0xf] %v909
    %1038 = vst [vmem:[#allocation2 + $0xf4] sm:$0xf] %v910
    %1039 = vst [vmem:[#allocation2 + $0xf8] sm:$0xf] %v911
    %1040 = vst [vmem:[#allocation2 + $0xfc] sm:$0xf] %v912
    // Predicated region
    $region14: #{tpu_custom_call.1} parent=1 // pred_check
      _
    $region15: #{tpu_custom_call.1} parent=1 // pred_check_branch
      %1042 = sbr.rel (0) target = $region17
    $region16: #{tpu_custom_call.1} parent=1 // pred_region
      %s1044 = ssub.s32 4096, 4096
      %1045 = vsyncadd [#allocation3], %s1044
      %s1046 = sshll.u32 [#allocation2], 4
      %s1047 = int_to_ptr.vmem [resolvable:$true] %s1046
      %1052 = dma.vmem_to_hbm [thread:$0]  %s1047, 4096, %s3, [#allocation3], 64, 64, 4
    $region17: #{tpu_custom_call.1} parent=1 // pred_fallthru
      _
    // Predicated region
    $region18: #{tpu_custom_call.1} parent=1 // pred_check
      _
    $region19: #{tpu_custom_call.1} parent=1 // pred_check_branch
      %1054 = sbr.rel (0) target = $region21
    $region20: #{tpu_custom_call.1} parent=1 // pred_region
      %1055 = dma.done [#allocation3], 4096
    $region21: #{tpu_custom_call.1} parent=1 // pred_fallthru
      _
    %1056 = vsyncpa [#allocation3], 1

</llo_original>
